<compile_context>
chip_gen: v5e
topology: v5e:2x2
jax: 0.10.0
libtpu: 0.0.40
codegen_flags: <defaults>
</compile_context>

<pallas_src>
import math

import jax
import jax.numpy as jnp
from jax.experimental import pallas as pl
from jax.experimental.pallas import tpu as pltpu


def _make_kernel(tr, vocab):
    """Build a kernel for a fixed token-tile size `tr` and vocab size `vocab`."""

    def kernel(ids_ref, emb_hbm, pos_ref, out_ref, row_buf, sems):
        # ids_ref : (B*S,) int32 token ids, SMEM (scalar prefetch)
        # emb_hbm : (V, D) embedding table, HBM (manual DMA gather)
        # pos_ref : (TR, D) positional tile, VMEM
        # out_ref : (TR, D) output tile, VMEM
        # row_buf : (TR, D) VMEM scratch for gathered rows
        # sems    : (TR,) DMA semaphores, one per row
        base = pl.program_id(0) * tr

        # Issue all row-gather DMAs for this tile (latency overlaps across rows).
        @pl.loop(0, tr)
        def _issue(t):
            tok = jnp.clip(ids_ref[base + t], 0, vocab - 1)
            pltpu.make_async_copy(emb_hbm.at[tok], row_buf.at[t], sems.at[t]).start()

        # Drain: wait for every row (src arg only supplies shape for the wait).
        @pl.loop(0, tr)
        def _drain(t):
            pltpu.make_async_copy(emb_hbm.at[0], row_buf.at[t], sems.at[t]).wait()

        # One dense vector add + one dense store per grid step.
        out_ref[...] = (row_buf[...] + pos_ref[...]).astype(out_ref.dtype)

    return kernel


def _pick_token_tile(seq_len):
    # Largest sublane-aligned tile that divides S (so a tile's positions are a
    # contiguous block of the positional encoding).
    for cand in (256, 128, 64, 32, 16, 8):
        if seq_len % cand == 0:
            return cand
    return seq_len  # fallback for tiny / odd S


def transformer_embedding(ids, emb_table, pos_encoding):
    """ids: (B, S) int32; emb_table: (V, D); pos_encoding: (max_len, D)."""
    B, S = ids.shape
    V, D = emb_table.shape
    N = B * S

    TR = _pick_token_tile(S)
    G = N // TR                 # grid steps over flattened tokens
    pos_blocks = S // TR        # positional tiles per sequence

    pos = pos_encoding[:S, :]                       # PositionalEmbedding.forward
    ids_flat = ids.reshape(N).astype(jnp.int32)     # SMEM scalar-prefetch operand

    itemsize = jnp.dtype(emb_table.dtype).itemsize
    tile_bytes = TR * D * itemsize
    # pos (2x) + out (2x) + row_buf (1x) + headroom; capped well under v7x's 64 MiB.
    vmem_limit = int(min(48 * 2**20, max(4 * 2**20, 16 * tile_bytes)))

    kernel = _make_kernel(TR, V)

    out_flat = pl.pallas_call(
        kernel,
        out_shape=jax.ShapeDtypeStruct((N, D), emb_table.dtype),
        grid_spec=pltpu.PrefetchScalarGridSpec(
            num_scalar_prefetch=1,
            grid=(G,),
            in_specs=[
                pl.BlockSpec(memory_space=pl.ANY),                          # (V, D) table stays in HBM
                pl.BlockSpec((TR, D), lambda i, ids: (i % pos_blocks, 0)),  # pos tile for this token tile
            ],
            out_specs=pl.BlockSpec((TR, D), lambda i, ids: (i, 0)),
            scratch_shapes=[
                pltpu.VMEM((TR, D), emb_table.dtype),    # gathered rows
                pltpu.SemaphoreType.DMA((TR,)),          # one sem per row DMA
            ],
        ),
        compiler_params=pltpu.CompilerParams(
            dimension_semantics=("parallel",),           # independent token tiles (2 TCs on v7x)
            vmem_limit_bytes=vmem_limit,
        ),
    )(ids_flat, emb_table, pos)

    return out_flat.reshape(B, S, D)


def make_params(vocab_size, d_model, max_len, key):
    # nn.Embedding default init: N(0, 1); padding_idx=1 row zeroed.
    emb = jax.random.normal(key, (vocab_size, d_model), dtype=jnp.float32)
    emb = emb.at[1, :].set(0.0)

    # Sinusoidal positional encoding (same recipe as PositionalEmbedding).
    pos = jnp.arange(max_len, dtype=jnp.float32)[:, None]              # (max_len, 1)
    _2i = jnp.arange(0, d_model, 2, dtype=jnp.float32)                 # (d_model/2,)
    div_term = jnp.exp(_2i * (-math.log(10000.0) / d_model))
    enc = jnp.zeros((max_len, d_model), dtype=jnp.float32)
    enc = enc.at[:, 0::2].set(jnp.sin(pos * div_term))
    enc = enc.at[:, 1::2].set(jnp.cos(pos * div_term))
    return emb, enc


def reference(ids, emb_table, pos_encoding):
    B, S = ids.shape
    tok = emb_table[ids]                    # (B, S, D)
    return tok + pos_encoding[:S, :][None]  # dropout = identity (eval mode)


if __name__ == "__main__":
    vocab_size, d_model, max_len = 64, 32, 16
    batch, seq = 2, 8

    key = jax.random.PRNGKey(0)
    k_emb, k_ids = jax.random.split(key)
    emb_table, pos_encoding = make_params(vocab_size, d_model, max_len, k_emb)

    ids = jax.random.randint(k_ids, (batch, seq), 0, vocab_size, dtype=jnp.int32)
    # make sure the padding index appears at least once
    ids = ids.at[0, 0].set(1)

    out = transformer_embedding(ids, emb_table, pos_encoding)
    out = jax.block_until_ready(out)

    ref = reference(ids, emb_table, pos_encoding)
    assert out.shape == (batch, seq, d_model)
    assert jnp.allclose(out, ref, atol=1e-6, rtol=1e-6)

    print("KERNEL_OK")
</pallas_src>

<mosaic_0001>
module attributes {stable_mosaic.version = 11 : i64} {
  func.func @kernel(%arg0: i32, %arg1: memref<16xi32, #tpu.memory_space<smem>>, %arg2: memref<64x32xf32, #tpu.memory_space<any>>, %arg3: memref<8x32xf32, #tpu.memory_space<vmem>>, %arg4: memref<8x32xf32, #tpu.memory_space<vmem>>, %arg5: memref<8x32xf32, #tpu.memory_space<vmem>>, %arg6: memref<8x!tpu.dma_semaphore, #tpu.memory_space<semaphore_mem>>) attributes {dimension_semantics = [#tpu.dimension_semantics<parallel>], iteration_bounds = array<i64: 2>, scalar_prefetch = 1 : i64, scratch_operands = 2 : i64, tpu.core_type = #tpu.core_type<tc>, window_params = [{}, {transform_indices = @transform_1, window_bounds = array<i64: 8, 32>}, {transform_indices = @transform_2, window_bounds = array<i64: 8, 32>}]} {
    %c8_i32 = arith.constant 8 : i32
    %0 = arith.muli %arg0, %c8_i32 : i32
    %c0_i32 = arith.constant 0 : i32
    %c8_i32_0 = arith.constant 8 : i32
    %1 = arith.addi %c0_i32, %c8_i32_0 : i32
    %c1_i32 = arith.constant 1 : i32
    scf.for %arg7 = %c0_i32 to %1 step %c1_i32  : i32 {
      %c1_i32_11 = arith.constant 1 : i32
      %7 = arith.muli %arg7, %c1_i32_11 : i32
      %c0_i32_12 = arith.constant 0 : i32
      %8 = arith.addi %c0_i32_12, %7 : i32
      %9 = arith.addi %0, %8 : i32
      %10 = arith.index_cast %9 : i32 to index
      %11 = memref.load %arg1[%10] : memref<16xi32, #tpu.memory_space<smem>>
      %c0_i32_13 = arith.constant 0 : i32
      %c63_i32 = arith.constant 63 : i32
      %12 = arith.maxsi %c0_i32_13, %11 : i32
      %13 = arith.minsi %c63_i32, %12 : i32
      %c0_i32_14 = arith.constant 0 : i32
      %14 = tpu.memref_slice %arg2[%13, %c0_i32_14] : memref<64x32xf32, #tpu.memory_space<any>> -> memref<1x32xf32, #tpu.memory_space<any>>
      %15 = tpu.memref_squeeze %14 : memref<1x32xf32, #tpu.memory_space<any>> -> memref<32xf32, #tpu.memory_space<any>>
      %c0_i32_15 = arith.constant 0 : i32
      %16 = tpu.memref_slice %arg5[%8, %c0_i32_15] : memref<8x32xf32, #tpu.memory_space<vmem>> -> memref<1x32xf32, #tpu.memory_space<vmem>>
      %17 = tpu.memref_squeeze %16 : memref<1x32xf32, #tpu.memory_space<vmem>> -> memref<32xf32, #tpu.memory_space<vmem>>
      %18 = tpu.memref_slice %arg6[%8] : memref<8x!tpu.dma_semaphore, #tpu.memory_space<semaphore_mem>> -> memref<1x!tpu.dma_semaphore, #tpu.memory_space<semaphore_mem>>
      %19 = tpu.memref_squeeze %18 : memref<1x!tpu.dma_semaphore, #tpu.memory_space<semaphore_mem>> -> memref<!tpu.dma_semaphore, #tpu.memory_space<semaphore_mem>>
      tpu.enqueue_dma source(%15 : memref<32xf32, #tpu.memory_space<any>>) target(%17 : memref<32xf32, #tpu.memory_space<vmem>>) target_semaphore(%19 : memref<!tpu.dma_semaphore, #tpu.memory_space<semaphore_mem>>)
    }
    %c8_i32_1 = arith.constant 8 : i32
    %c0_i32_2 = arith.constant 0 : i32
    %c8_i32_3 = arith.constant 8 : i32
    %2 = arith.addi %c0_i32_2, %c8_i32_3 : i32
    %c1_i32_4 = arith.constant 1 : i32
    scf.for %arg7 = %c0_i32_2 to %2 step %c1_i32_4  : i32 {
      %c1_i32_11 = arith.constant 1 : i32
      %7 = arith.muli %arg7, %c1_i32_11 : i32
      %c0_i32_12 = arith.constant 0 : i32
      %8 = arith.addi %c0_i32_12, %7 : i32
      %c0_i32_13 = arith.constant 0 : i32
      %c0_i32_14 = arith.constant 0 : i32
      %9 = tpu.memref_slice %arg2[%c0_i32_13, %c0_i32_14] : memref<64x32xf32, #tpu.memory_space<any>> -> memref<1x32xf32, #tpu.memory_space<any>>
      %10 = tpu.memref_squeeze %9 : memref<1x32xf32, #tpu.memory_space<any>> -> memref<32xf32, #tpu.memory_space<any>>
      %c0_i32_15 = arith.constant 0 : i32
      %11 = tpu.memref_slice %arg5[%8, %c0_i32_15] : memref<8x32xf32, #tpu.memory_space<vmem>> -> memref<1x32xf32, #tpu.memory_space<vmem>>
      %12 = tpu.memref_squeeze %11 : memref<1x32xf32, #tpu.memory_space<vmem>> -> memref<32xf32, #tpu.memory_space<vmem>>
      %13 = tpu.memref_slice %arg6[%8] : memref<8x!tpu.dma_semaphore, #tpu.memory_space<semaphore_mem>> -> memref<1x!tpu.dma_semaphore, #tpu.memory_space<semaphore_mem>>
      %14 = tpu.memref_squeeze %13 : memref<1x!tpu.dma_semaphore, #tpu.memory_space<semaphore_mem>> -> memref<!tpu.dma_semaphore, #tpu.memory_space<semaphore_mem>>
      tpu.wait_dma2 semaphore(%14 : memref<!tpu.dma_semaphore, #tpu.memory_space<semaphore_mem>>) src(%10 : memref<32xf32, #tpu.memory_space<any>>) dst(%12 : memref<32xf32, #tpu.memory_space<vmem>>)
    }
    %c8_i32_5 = arith.constant 8 : i32
    %c0 = arith.constant 0 : index
    %c0_6 = arith.constant 0 : index
    %3 = vector.load %arg5[%c0, %c0_6] : memref<8x32xf32, #tpu.memory_space<vmem>>, vector<8x32xf32>
    %c0_7 = arith.constant 0 : index
    %c0_8 = arith.constant 0 : index
    %4 = vector.load %arg3[%c0_7, %c0_8] : memref<8x32xf32, #tpu.memory_space<vmem>>, vector<8x32xf32>
    %5 = arith.addf %3, %4 : vector<8x32xf32>
    %c0_9 = arith.constant 0 : index
    %c0_10 = arith.constant 0 : index
    %6 = vector.load %arg4[%c0_9, %c0_10] : memref<8x32xf32, #tpu.memory_space<vmem>>, vector<8x32xf32>
    tpu.vector_store %arg4[%c0_9, %c0_10], %5 {strides = array<i32>} : memref<8x32xf32, #tpu.memory_space<vmem>>, vector<8x32xf32>,
    return
  }
  func.func @transform_1(%arg0: i32, %arg1: memref<16xi32, #tpu.memory_space<smem>>) -> (i32, i32) {
    %c1_i32 = arith.constant 1 : i32
    %c0_i32 = arith.constant 0 : i32
    %0 = arith.cmpi eq, %c1_i32, %c0_i32 : i32
    %c1_i32_0 = arith.constant 1 : i32
    %1 = arith.select %0, %c1_i32_0, %c1_i32 : i32
    %2 = arith.remsi %arg0, %1 : i32
    %c0_i32_1 = arith.constant 0 : i32
    %3 = arith.cmpi ne, %2, %c0_i32_1 : i32
    %c0_i32_2 = arith.constant 0 : i32
    %4 = arith.cmpi slt, %2, %c0_i32_2 : i32
    %c0_i32_3 = arith.constant 0 : i32
    %5 = arith.cmpi slt, %1, %c0_i32_3 : i32
    %6 = arith.xori %4, %5 : i1
    %7 = arith.andi %6, %3 : i1
    %8 = arith.addi %2, %1 : i32
    %9 = arith.select %7, %8, %2 : i32
    %c0_i32_4 = arith.constant 0 : i32
    %c0_i32_5 = arith.constant 0 : i32
    return %9, %c0_i32_4 : i32, i32
  }
  func.func @transform_2(%arg0: i32, %arg1: memref<16xi32, #tpu.memory_space<smem>>) -> (i32, i32) {
    %c0_i32 = arith.constant 0 : i32
    %c0_i32_0 = arith.constant 0 : i32
    return %arg0, %c0_i32 : i32, i32
  }
}

</mosaic_0001>

<llo_original>
// kernel: tpu_custom_call.1
$region0: #{tpu_custom_call.1}
  #allocation0 [shape = 'u32[]', space=smem, size = 0x4, offset = 0x4, fixed_abs, tag = 'smem constant byte address 0x4 - core index']
  #allocation1 [shape = 'u32[72,128]{1,0:T(1,128)}', space=vmem, size = 0x9000, scoped, tag = 'internal scratch']
  #allocation2 [shape = 'f32[8,32]{1,0:T(8,128)}', space=vmem, size = 0x1000, scoped, tag = 'scratch operand']
  #allocation3 [shape = 's32[8]{0}', space=sflag, size = 0x20, scoped, tag = 'scratch operand']
  #allocation4 [shape = 's32[1]{0}', space=sflag, size = 0x4, scoped, tag = 'scoped memory for tpu_custom_call.1']
  #allocation5 [shape = 'u8[512]{0}', space=smem, size = 0x200, scoped, tag = 'prefetched SMEM operand 0']
  #allocation8 [shape = 's32[]', space=sflag, size = 0x4, offset = 0, fixed_abs, tag = 'sflag constant byte address 0x0 - dummy sync flag']
  %s0 = inlined_call_operand.vmem [shape: s32[16], index: 0, kind: input, shape index: {}]
  %s1 = inlined_call_operand.vmem [shape: f32[64,32], index: 1, kind: input, shape index: {}]
  %s2 = inlined_call_operand.vmem [shape: f32[8,32], index: 2, kind: input, shape index: {}]
  %s3 = inlined_call_operand.hbm [shape: f32[16,32], index: 3, kind: output, shape index: {}]
  %s4 = sld [smem:[#allocation0]]
  $region81: #{tpu_custom_call.1} parent=0
    _
  %s6 = ssub.s32 1, %s4
  %s7 = scalar_select 0, %s6, %s4
  %s9 = sshll.u32 %s0, 4
  %s10 = int_to_ptr.vmem [resolvable:$true] %s9
  %12 = dma.vmem_to_smem %s10, 16, [#allocation5], [#allocation4]
  %14 = dma.done [#allocation4], 16
  %15 = sfence
  $region1: #{tpu_custom_call.1} parent=0
    #allocation6 [shape = 'u8[8192]{0}', space=vmem, size = 0x2000, scoped, tag = 'output window, operand 0']
    #allocation7 [shape = 's32[2]{0}', space=sflag, size = 0x8, scoped, tag = 'scoped memory for tpu_custom_call.1']
    %16 = vsyncpa [#allocation7], 0
    %s17 = scalar_lea.sflag [#allocation7], 1
    %18 = vsyncpa %s17, 0
    loop: start=0, step=1, limit=4
    $region2: #{tpu_custom_call.1} parent=1 // loop_pre_header
      _
    $region3: #{tpu_custom_call.1} parent=1 // loop_header
      %s20 = sphi 0, %s24
      %p21 = scmp.ge.s32.totalorder %s20, 4
      %s28 = sphi 0, %s28
      %s30 = sphi 0, %s28
      %s31 = sphi 0, %s30
      %s45 = sphi 0, %s31
      %s51 = sphi 0, %s53
      %s54 = sphi 0, %s51
      %s55 = sphi 0, %s54
      %s71 = sphi 0, %s55
    $region4: #{tpu_custom_call.1} parent=1 // loop_header_branch
      %23 = sbr.rel (%p21) target = $region8
    $region5: #{tpu_custom_call.1} parent=1 // loop_body
      %s25 = ssub.s32 %s20, 1
      %s26 = ssub.s32 %s20, 2
      %s27 = sadd.s32 %s20, 1
      %s29 = sadd.s32 %s28, 1
      %p32 = scmp.eq.s32.totalorder %s20, 1
      %p33 = scmp.ne.s32.totalorder %s28, %s30
      %p34 = scmp.eq.s32.totalorder %s20, 0
      %p35 = por %p33, %p34
      %p36 = scmp.ne.s32.totalorder %s28, %s30
      %p37 = scmp.eq.s32.totalorder %s25, 1
      %p38 = por %p36, %p37
      %p39 = scmp.ne.s32.totalorder %s30, %s31
      %p40 = scmp.eq.s32.totalorder %s25, 0
      %p41 = por %p39, %p40
      %p42 = scmp.ne.s32.totalorder %s30, %s31
      %p43 = scmp.eq.s32.totalorder %s26, 1
      %p44 = por %p42, %p43
      %p46 = scmp.ne.s32.totalorder %s31, %s45
      %p47 = scmp.eq.s32.totalorder %s26, 0
      %p48 = por %p46, %p47
      %s49 = ssub.s32 %s20, %s27
      %p50 = scmp.eq.s32.totalorder %s49, 0
      %s52 = sadd.s32 %s51, 1
      %s53 = scalar_select %p50, %s51, %s52
      %p56 = pneg %p50
      %p57 = scmp.eq.s32.totalorder %s20, 1
      %p58 = por %p56, %p57
      %p59 = scmp.ne.s32.totalorder %s51, %s54
      %p60 = scmp.eq.s32.totalorder %s20, 0
      %p61 = por %p59, %p60
      %p62 = scmp.ne.s32.totalorder %s51, %s54
      %p63 = scmp.eq.s32.totalorder %s25, 1
      %p64 = por %p62, %p63
      %p65 = scmp.ne.s32.totalorder %s54, %s55
      %p66 = scmp.eq.s32.totalorder %s25, 0
      %p67 = por %p65, %p66
      %p68 = scmp.ne.s32.totalorder %s54, %s55
      %p69 = scmp.eq.s32.totalorder %s26, 1
      %p70 = por %p68, %p69
      %p72 = scmp.ne.s32.totalorder %s55, %s71
      %p73 = scmp.eq.s32.totalorder %s26, 0
      %p74 = por %p72, %p73
      %p75 = scmp.le.s32.totalorder 1, %s20
      %p76 = scmp.lt.s32.totalorder %s20, 3
      %p77 = pnand %p75, %p76
      %p78 = pneg %p77
      // Predicated region
      $region9: #{tpu_custom_call.1} parent=5 // pred_check
        _
      $region10: #{tpu_custom_call.1} parent=5 // pred_check_branch
        %80 = sbr.rel (%p77) target = $region12
      $region11: #{tpu_custom_call.1} parent=5 // pred_region
        %s81 = ssub.s32 %s20, 1
        // Predicated region
        $region13: #{tpu_custom_call.1} parent=11 // pred_check
          %p82 = pneg %p41
        $region14: #{tpu_custom_call.1} parent=11 // pred_check_branch
          %84 = sbr.rel (%p82) target = $region16
        $region15: #{tpu_custom_call.1} parent=11 // pred_region
          _
        $region16: #{tpu_custom_call.1} parent=11 // pred_fallthru
          _
      $region12: #{tpu_custom_call.1} parent=5 // pred_fallthru
        _
      %p85 = scmp.lt.s32.totalorder %s20, 2
      // Predicated region
      $region17: #{tpu_custom_call.1} parent=5 // pred_check
        %p86 = pneg %p85
      $region18: #{tpu_custom_call.1} parent=5 // pred_check_branch
        %88 = sbr.rel (%p86) target = $region20
      $region19: #{tpu_custom_call.1} parent=5 // pred_region
        _
      $region20: #{tpu_custom_call.1} parent=5 // pred_fallthru
        _
      %p89 = scmp.le.s32.totalorder 1, %s20
      %p90 = scmp.lt.s32.totalorder %s20, 3
      %p91 = pnand %p89, %p90
      %p92 = pneg %p91
      // Predicated region
      $region21: #{tpu_custom_call.1} parent=5 // pred_check
        _
      $region22: #{tpu_custom_call.1} parent=5 // pred_check_branch
        %94 = sbr.rel (%p91) target = $region24
      $region23: #{tpu_custom_call.1} parent=5 // pred_region
        %s95 = ssub.s32 %s20, 1
        %p96 = pneg %p41
        %p97 = pneg %p38
        %p98 = pneg %p67
        %p99 = pneg %p64
        %s100 = sand.u32 %s54, 1
        %s101 = scalar_lea.sflag [#allocation7], %s100
        %s102 = sand.u32 %s54, 1
        %s103 = smul.addr %s102, 8
        %s104 = scalar_lea.vmem [#allocation6], %s103
        %s105 = smul.u32 %s25, 8
        loop: start=0, step=1, limit=8
        $region25: #{tpu_custom_call.1} parent=23 // loop_pre_header
          _
        $region26: #{tpu_custom_call.1} parent=23 // loop_header
          %s107 = sphi 0, %s111
          %p108 = scmp.ge.s32.totalorder %s107, 8
        $region27: #{tpu_custom_call.1} parent=23 // loop_header_branch
          %110 = sbr.rel (%p108) target = $region31
        $region28: #{tpu_custom_call.1} parent=23 // loop_body
          %s112 = sadd.s32 %s105, %s107
          %s113 = sld [smem:[#allocation5 + %s112]]
          %p114 = scmp.gt.s32.totalorder %s113, 0
          %s115 = scalar_select %p114, %s113, 0
          %p116 = scmp.lt.s32.totalorder %s115, 63
          %s117 = scalar_select %p116, %s115, 63
          %s118 = scalar_lea.vmem %s1, %s117
          %s119 = scalar_lea.vmem [#allocation2], %s107
          %s120 = scalar_lea.sflag [#allocation3], %s107
          // Predicated region
          $region32: #{tpu_custom_call.1} parent=28 // pred_check
            _
          $region33: #{tpu_custom_call.1} parent=28 // pred_check_branch
            %122 = sbr.rel target = $region35
          $region34: #{tpu_custom_call.1} parent=28 // pred_region
            // Predicated region
            $region47: #{tpu_custom_call.1} parent=34 // pred_check
              _
            $region48: #{tpu_custom_call.1} parent=34 // pred_check_branch
              %138 = sbr.rel (0) target = $region50
            $region49: #{tpu_custom_call.1} parent=34 // pred_region
              %s140 = ssub.s32 2, 1
              loop: start=0, step=1, limit=1
              $region51: #{tpu_custom_call.1} parent=49 // loop_pre_header
                _
              $region52: #{tpu_custom_call.1} parent=49 // loop_header
                %s142 = sphi 0, %s146
                %p143 = scmp.ge.s32.totalorder %s142, 1
                %s147 = sphi %s118, %s118
                %s148 = sphi %s119, %s119
              $region53: #{tpu_custom_call.1} parent=49 // loop_header_branch
                %145 = sbr.rel (%p143) target = $region57
              $region54: #{tpu_custom_call.1} parent=49 // loop_body
                %v149 = vld [vmem:[%s147] sm:%s140]
                %150 = vst [vmem:[%s148] sm:%s140] %v149
              $region55: #{tpu_custom_call.1} parent=49 // loop_footer
                %s146 = sadd.s32 1, %s142
              $region56: #{tpu_custom_call.1} parent=49 // loop_footer_branch
                %141 = sbr.rel target = $region52
              $region57: #{tpu_custom_call.1} parent=49 // loop_exit
                _
            $region50: #{tpu_custom_call.1} parent=34 // pred_fallthru
              _
          $region35: #{tpu_custom_call.1} parent=28 // pred_fallthru
            _
          // Predicated region
          $region36: #{tpu_custom_call.1} parent=28 // pred_check
            _
          $region37: #{tpu_custom_call.1} parent=28 // pred_check_branch
            %124 = sbr.rel (0) target = $region39
          $region38: #{tpu_custom_call.1} parent=28 // pred_region
            %s126 = ssub.s32 2, 1
            loop: start=0, step=1, limit=1
            $region40: #{tpu_custom_call.1} parent=38 // loop_pre_header
              _
            $region41: #{tpu_custom_call.1} parent=38 // loop_header
              %s128 = sphi 0, %s132
              %p129 = scmp.ge.s32.totalorder %s128, 1
              %s133 = sphi %s118, %s118
              %s134 = sphi %s119, %s119
            $region42: #{tpu_custom_call.1} parent=38 // loop_header_branch
              %131 = sbr.rel (%p129) target = $region46
            $region43: #{tpu_custom_call.1} parent=38 // loop_body
              %v135 = vld [vmem:[%s133] sm:%s126]
              %136 = vst [vmem:[%s134] sm:%s126] %v135
            $region44: #{tpu_custom_call.1} parent=38 // loop_footer
              %s132 = sadd.s32 1, %s128
            $region45: #{tpu_custom_call.1} parent=38 // loop_footer_branch
              %127 = sbr.rel target = $region41
            $region46: #{tpu_custom_call.1} parent=38 // loop_exit
              _
          $region39: #{tpu_custom_call.1} parent=28 // pred_fallthru
            _
          // Predicated region
          $region58: #{tpu_custom_call.1} parent=28 // pred_check
            _
          $region59: #{tpu_custom_call.1} parent=28 // pred_check_branch
            %153 = sbr.rel (0) target = $region61
          $region60: #{tpu_custom_call.1} parent=28 // pred_region
            %154 = vsyncadd %s120, 16
          $region61: #{tpu_custom_call.1} parent=28 // pred_fallthru
            _
        $region29: #{tpu_custom_call.1} parent=23 // loop_footer
          %s111 = sadd.s32 1, %s107
        $region30: #{tpu_custom_call.1} parent=23 // loop_footer_branch
          %106 = sbr.rel target = $region26
        $region31: #{tpu_custom_call.1} parent=23 // loop_exit
          _
        loop: start=0, step=1, limit=8
        $region62: #{tpu_custom_call.1} parent=23 // loop_pre_header
          _
        $region63: #{tpu_custom_call.1} parent=23 // loop_header
          %s156 = sphi 0, %s160
          %p157 = scmp.ge.s32.totalorder %s156, 8
        $region64: #{tpu_custom_call.1} parent=23 // loop_header_branch
          %159 = sbr.rel (%p157) target = $region68
        $region65: #{tpu_custom_call.1} parent=23 // loop_body
          %s161 = scalar_lea.sflag [#allocation3], %s156
          %163 = dma.done %s161, 16
        $region66: #{tpu_custom_call.1} parent=23 // loop_footer
          %s160 = sadd.s32 1, %s156
        $region67: #{tpu_custom_call.1} parent=23 // loop_footer_branch
          %155 = sbr.rel target = $region63
        $region68: #{tpu_custom_call.1} parent=23 // loop_exit
          _
        %v164 = vld [vmem:[#allocation2] sm:$0xff]
        %v165 = vld [vmem:[%s2] sm:$0xff]
        %v166 = vadd.f32 %v164, %v165
        %vm167 = vcmask 261120
        %168 = vst.msk [vmem:[%s104] sm:$0xff] %vm167, %v166
        %s169 = sand.u32 %s54, 1
        %s170 = scalar_lea.sflag [#allocation7], %s169
        %s171 = sand.u32 %s54, 1
        %s172 = smul.addr %s171, 8
        %s173 = scalar_lea.vmem [#allocation6], %s172
        // Predicated region
        $region69: #{tpu_custom_call.1} parent=23 // pred_check
          %p174 = pneg %p64
        $region70: #{tpu_custom_call.1} parent=23 // pred_check_branch
          %176 = sbr.rel (%p174) target = $region72
        $region71: #{tpu_custom_call.1} parent=23 // pred_region
          %178 = vsyncadd %s170, 0
          %s179 = smul.addr %s25, 8
          %s180 = scalar_lea.hbm %s3, %s179
          %s182 = sshll.u32 %s173, 4
          %s183 = int_to_ptr.vmem [resolvable:$true] %s182
          %s184 = sshll.u32 %s180, 4
          %s185 = int_to_ptr.hbm [resolvable:$true] %s184
          %187 = dma.vmem_to_hbm [thread:$0]  %s183, 128, %s185, %s170
        $region72: #{tpu_custom_call.1} parent=23 // pred_fallthru
          _
      $region24: #{tpu_custom_call.1} parent=5 // pred_fallthru
        _
      %p188 = scmp.le.s32.totalorder 2, %s20
      // Predicated region
      $region73: #{tpu_custom_call.1} parent=5 // pred_check
        %p189 = pneg %p188
      $region74: #{tpu_custom_call.1} parent=5 // pred_check_branch
        %191 = sbr.rel (%p189) target = $region76
      $region75: #{tpu_custom_call.1} parent=5 // pred_region
        %s192 = ssub.s32 %s20, 2
        // Predicated region
        $region77: #{tpu_custom_call.1} parent=75 // pred_check
          %p193 = pneg %p70
        $region78: #{tpu_custom_call.1} parent=75 // pred_check_branch
          %195 = sbr.rel (%p193) target = $region80
        $region79: #{tpu_custom_call.1} parent=75 // pred_region
          %s196 = sand.u32 %s55, 1
          %s197 = scalar_lea.sflag [#allocation7], %s196
          %s198 = sand.u32 %s55, 1
          %s199 = smul.addr %s198, 8
          %s200 = scalar_lea.vmem [#allocation6], %s199
          %202 = dma.done %s197, 128
        $region80: #{tpu_custom_call.1} parent=75 // pred_fallthru
          _
      $region76: #{tpu_custom_call.1} parent=5 // pred_fallthru
        _
    $region6: #{tpu_custom_call.1} parent=1 // loop_footer
      %s24 = sadd.s32 1, %s20
    $region7: #{tpu_custom_call.1} parent=1 // loop_footer_branch
      %19 = sbr.rel target = $region3
    $region8: #{tpu_custom_call.1} parent=1 // loop_exit
      _
    %203 = vsyncpa [#allocation7], 1
    %s204 = scalar_lea.sflag [#allocation7], 1
    %205 = vsyncpa %s204, 1
  %206 = vsyncmov [#allocation3]
  %s207 = vpop.sfrf %206
  %p208 = scmp.eq.s32.totalorder %s207, 0
  %p209 = pneg %p208
  %211 = shalt.err (%p209)
  %s212 = scalar_lea.sflag [#allocation3], 1
  %213 = vsyncmov %s212
  %s214 = vpop.sfrf %213
  %p215 = scmp.eq.s32.totalorder %s214, 0
  %p216 = pneg %p215
  %218 = shalt.err (%p216)
  %s219 = scalar_lea.sflag [#allocation3], 2
  %220 = vsyncmov %s219
  %s221 = vpop.sfrf %220
  %p222 = scmp.eq.s32.totalorder %s221, 0
  %p223 = pneg %p222
  %225 = shalt.err (%p223)
  %s226 = scalar_lea.sflag [#allocation3], 3
  %227 = vsyncmov %s226
  %s228 = vpop.sfrf %227
  %p229 = scmp.eq.s32.totalorder %s228, 0
  %p230 = pneg %p229
  %232 = shalt.err (%p230)
  %s233 = scalar_lea.sflag [#allocation3], 4
  %234 = vsyncmov %s233
  %s235 = vpop.sfrf %234
  %p236 = scmp.eq.s32.totalorder %s235, 0
  %p237 = pneg %p236
  %239 = shalt.err (%p237)
  %s240 = scalar_lea.sflag [#allocation3], 5
  %241 = vsyncmov %s240
  %s242 = vpop.sfrf %241
  %p243 = scmp.eq.s32.totalorder %s242, 0
  %p244 = pneg %p243
  %246 = shalt.err (%p244)
  %s247 = scalar_lea.sflag [#allocation3], 6
  %248 = vsyncmov %s247
  %s249 = vpop.sfrf %248
  %p250 = scmp.eq.s32.totalorder %s249, 0
  %p251 = pneg %p250
  %253 = shalt.err (%p251)
  %s254 = scalar_lea.sflag [#allocation3], 7
  %255 = vsyncmov %s254
  %s256 = vpop.sfrf %255
  %p257 = scmp.eq.s32.totalorder %s256, 0
  %p258 = pneg %p257
  %260 = shalt.err (%p258)

</llo_original>
